<compile_context>
chip_gen: v6e
topology: v6e:2x2x1
jax: 0.10.0
libtpu: 0.0.40
codegen_flags: <defaults>
</compile_context>

<pallas_src>
import functools

import jax
import jax.numpy as jnp
from jax.experimental import pallas as pl
from jax.experimental.pallas import tpu as pltpu


_INV_SQRT2 = 0.7071067811865476


def _gelu_exact(x):
    # torch.nn.GELU() default == exact (erf) GELU, computed in f32.
    return 0.5 * x * (1.0 + jax.lax.erf(x * _INV_SQRT2))


# ----------------------------------------------------------------------------- kernels


def _ff_kernel(x_ref, w1_ref, b1_ref, w2_ref, b2_ref, o_ref, acc_ref):
    """Non-GLU path: one inner_dim chunk per grid step (axis 1)."""
    k = pl.program_id(1)

    @pl.when(k == 0)
    def _init():
        acc_ref[...] = jnp.zeros_like(acc_ref)

    # First matmul on the streamed inner_dim chunk; f32 accumulate on the MXU.
    h = jnp.dot(x_ref[...], w1_ref[...], preferred_element_type=jnp.float32)
    h = _gelu_exact(h + b1_ref[...].astype(jnp.float32))
    # Cast back so the second matmul also runs at full MXU rate (bf16 operands).
    acc_ref[...] += jnp.dot(h.astype(w2_ref.dtype), w2_ref[...],
                            preferred_element_type=jnp.float32)

    @pl.when(k == pl.num_programs(1) - 1)
    def _finalize():
        # Dropout(p=0.0) -> identity.  Single b2 broadcast per row tile.
        o_ref[...] = (acc_ref[...] + b2_ref[...].astype(jnp.float32)).astype(o_ref.dtype)


def _ff_geglu_kernel(x_ref, wv_ref, bv_ref, wg_ref, bg_ref, w2_ref, b2_ref,
                     o_ref, acc_ref):
    """GLU path: value/gate projections are separate operands (no in-kernel slice)."""
    k = pl.program_id(1)

    @pl.when(k == 0)
    def _init():
        acc_ref[...] = jnp.zeros_like(acc_ref)

    x = x_ref[...]
    val = jnp.dot(x, wv_ref[...], preferred_element_type=jnp.float32)
    val = val + bv_ref[...].astype(jnp.float32)
    gate = jnp.dot(x, wg_ref[...], preferred_element_type=jnp.float32)
    gate = gate + bg_ref[...].astype(jnp.float32)
    h = (val * _gelu_exact(gate)).astype(w2_ref.dtype)
    acc_ref[...] += jnp.dot(h, w2_ref[...], preferred_element_type=jnp.float32)

    @pl.when(k == pl.num_programs(1) - 1)
    def _finalize():
        o_ref[...] = (acc_ref[...] + b2_ref[...].astype(jnp.float32)).astype(o_ref.dtype)


# ----------------------------------------------------------------------------- wrapper


def _pick_inner_chunk(inner_dim, target=512):
    """Largest lane-aligned (multiple of 128) divisor of inner_dim <= target."""
    if inner_dim % 128 != 0:
        return inner_dim  # must equal the full dim if not lane-aligned
    best = 128
    c = 128
    while c <= min(target, inner_dim):
        if inner_dim % c == 0:
            best = c
        c += 128
    return best


def _pick_row_tile(rows, itemsize, block_rows=None, target=256):
    """Sublane-aligned row tile (8 for f32, 16 for bf16, 32 for 8-bit)."""
    sublane = {4: 8, 2: 16, 1: 32}.get(itemsize, 8)
    tm = block_rows if block_rows is not None else min(target, rows)
    tm = max(sublane, ((tm + sublane - 1) // sublane) * sublane)
    return tm


def feed_forward_pallas(x, params, *, glu=False, block_rows=None, block_inner=None):
    """x: (B, N, dim). params: w1 (dim, proj_out), b1 (proj_out,),
    w2 (inner_dim, dim_out), b2 (dim_out,)  -- weights stored as (in, out)."""
    B, N, dim = x.shape
    w1, b1, w2, b2 = params["w1"], params["b1"], params["w2"], params["b2"]
    inner_dim, dim_out = w2.shape
    proj_out = w1.shape[1]
    assert proj_out == (2 * inner_dim if glu else inner_dim)

    rows = B * N
    x2d = x.reshape(rows, dim)

    itemsize = jnp.dtype(x.dtype).itemsize
    tm = _pick_row_tile(rows, itemsize, block_rows)
    padded_rows = ((rows + tm - 1) // tm) * tm
    if padded_rows != rows:
        x2d = jnp.pad(x2d, ((0, padded_rows - rows), (0, 0)))

    tk = block_inner or _pick_inner_chunk(inner_dim)
    assert inner_dim % tk == 0, "inner chunk must divide inner_dim"

    b2_2d = b2.reshape(1, dim_out)
    grid = (padded_rows // tm, inner_dim // tk)

    # VMEM budget for the tile plan (double-buffered pipeline bufs + f32 acc).
    w_item = jnp.dtype(w1.dtype).itemsize
    n_proj = 2 if glu else 1
    buf_elems = (tm * dim + n_proj * (dim * tk + tk) + tk * dim_out + dim_out
                 + tm * dim_out)
    vmem_bytes = int(2 * buf_elems * max(itemsize, w_item) * 1.3) \
        + tm * dim_out * 4 + (2 << 20)
    vmem_bytes = min(max(vmem_bytes, 32 * 1024 * 1024), 96 * 1024 * 1024)

    if glu:
        wv, wg = w1[:, :inner_dim], w1[:, inner_dim:]
        bv = b1[:inner_dim].reshape(1, inner_dim)
        bg = b1[inner_dim:].reshape(1, inner_dim)
        kernel = _ff_geglu_kernel
        in_specs = [
            pl.BlockSpec((tm, dim), lambda i, k: (i, 0)),        # x row tile (resident over k)
            pl.BlockSpec((dim, tk), lambda i, k: (0, k)),        # w_val chunk (streams)
            pl.BlockSpec((1, tk), lambda i, k: (0, k)),          # b_val chunk
            pl.BlockSpec((dim, tk), lambda i, k: (0, k)),        # w_gate chunk (streams)
            pl.BlockSpec((1, tk), lambda i, k: (0, k)),          # b_gate chunk
            pl.BlockSpec((tk, dim_out), lambda i, k: (k, 0)),    # w2 chunk (streams)
            pl.BlockSpec((1, dim_out), lambda i, k: (0, 0)),     # b2 (resident)
        ]
        args = (x2d, wv, bv, wg, bg, w2, b2_2d)
    else:
        b1_2d = b1.reshape(1, proj_out)
        kernel = _ff_kernel
        in_specs = [
            pl.BlockSpec((tm, dim), lambda i, k: (i, 0)),        # x row tile (resident over k)
            pl.BlockSpec((dim, tk), lambda i, k: (0, k)),        # w1 chunk (streams)
            pl.BlockSpec((1, tk), lambda i, k: (0, k)),          # b1 chunk
            pl.BlockSpec((tk, dim_out), lambda i, k: (k, 0)),    # w2 chunk (streams)
            pl.BlockSpec((1, dim_out), lambda i, k: (0, 0)),     # b2 (resident)
        ]
        args = (x2d, w1, b1_2d, w2, b2_2d)

    out2d = pl.pallas_call(
        kernel,
        out_shape=jax.ShapeDtypeStruct((padded_rows, dim_out), x.dtype),
        grid_spec=pltpu.PrefetchScalarGridSpec(
            num_scalar_prefetch=0,
            grid=grid,
            in_specs=in_specs,
            out_specs=pl.BlockSpec((tm, dim_out), lambda i, k: (i, 0)),
            scratch_shapes=[pltpu.VMEM((tm, dim_out), jnp.float32)],
        ),
        compiler_params=pltpu.CompilerParams(
            dimension_semantics=("parallel", "arbitrary"),
            vmem_limit_bytes=vmem_bytes,
        ),
    )(*args)

    if padded_rows != rows:
        out2d = out2d[:rows]
    return out2d.reshape(B, N, dim_out)


# ----------------------------------------------------------------------------- reference / init


def init_feed_forward_params(key, dim, dim_out=None, mult=4, glu=False,
                             dtype=jnp.float32):
    """Synthetic init matching nn.Linear shapes (weights stored as (in, out))."""
    inner_dim = int(dim * mult)
    dim_out = dim_out or dim
    proj_out = inner_dim * 2 if glu else inner_dim

    k1, k2, k3, k4 = jax.random.split(key, 4)
    lim1 = 1.0 / (dim ** 0.5)
    lim2 = 1.0 / (inner_dim ** 0.5)
    return {
        "w1": jax.random.uniform(k1, (dim, proj_out), dtype, -lim1, lim1),
        "b1": jax.random.uniform(k2, (proj_out,), dtype, -lim1, lim1),
        "w2": jax.random.uniform(k3, (inner_dim, dim_out), dtype, -lim2, lim2),
        "b2": jax.random.uniform(k4, (dim_out,), dtype, -lim2, lim2),
    }


def feed_forward_ref(x, params, *, glu=False):
    """Pure-JAX f32 reference."""
    f32 = jnp.float32
    w1, b1 = params["w1"].astype(f32), params["b1"].astype(f32)
    w2, b2 = params["w2"].astype(f32), params["b2"].astype(f32)
    h = jnp.einsum("bnd,dk->bnk", x.astype(f32), w1) + b1
    if glu:
        inner = w2.shape[0]
        h = h[..., :inner] * _gelu_exact(h[..., inner:])
    else:
        h = _gelu_exact(h)
    return jnp.einsum("bnk,kd->bnd", h, w2) + b2


# ----------------------------------------------------------------------------- main


if __name__ == "__main__":
    key = jax.random.PRNGKey(0)
    kx, kp, kx2, kp2, kx3, kp3 = jax.random.split(key, 6)

    # 1) Default module configuration: glu=False, dropout=0.0, dim_out=dim.
    B, N, dim, mult = 2, 8, 32, 4
    x = jax.random.normal(kx, (B, N, dim), dtype=jnp.float32)
    params = init_feed_forward_params(kp, dim, mult=mult, glu=False)
    out = jax.block_until_ready(feed_forward_pallas(x, params, glu=False))
    ref = feed_forward_ref(x, params, glu=False)
    assert out.shape == (B, N, dim)
    assert jnp.allclose(out, ref, atol=1e-4, rtol=1e-4), "glu=False mismatch"

    # 2) GEGLU variant, with a ragged row count to exercise the padding path.
    B2, N2 = 3, 5
    x2 = jax.random.normal(kx2, (B2, N2, dim), dtype=jnp.float32)
    params2 = init_feed_forward_params(kp2, dim, mult=mult, glu=True)
    out2 = jax.block_until_ready(feed_forward_pallas(x2, params2, glu=True))
    ref2 = feed_forward_ref(x2, params2, glu=True)
    assert out2.shape == (B2, N2, dim)
    assert jnp.allclose(out2, ref2, atol=1e-4, rtol=1e-4), "glu=True mismatch"

    # 3) bf16 operands (full-rate MXU path, f32 accumulation), looser tolerance.
    x3 = jax.random.normal(kx3, (B, N, dim), dtype=jnp.bfloat16)
    params3 = init_feed_forward_params(kp3, dim, mult=mult, glu=False,
                                       dtype=jnp.bfloat16)
    out3 = jax.block_until_ready(feed_forward_pallas(x3, params3, glu=False))
    ref3 = feed_forward_ref(x3, params3, glu=False)
    assert out3.shape == (B, N, dim)
    assert jnp.allclose(out3.astype(jnp.float32), ref3, atol=1e-1, rtol=1e-1), \
        "bf16 mismatch"

    print("KERNEL_OK")
</pallas_src>

<mosaic_0001>
module attributes {stable_mosaic.version = 11 : i64} {
  func.func @_ff_kernel(%arg0: i32, %arg1: i32, %arg2: memref<16x32xf32, #tpu.memory_space<vmem>>, %arg3: memref<32x128xf32, #tpu.memory_space<vmem>>, %arg4: memref<1x128xf32, #tpu.memory_space<vmem>>, %arg5: memref<128x32xf32, #tpu.memory_space<vmem>>, %arg6: memref<1x32xf32, #tpu.memory_space<vmem>>, %arg7: memref<16x32xf32, #tpu.memory_space<vmem>>, %arg8: memref<16x32xf32, #tpu.memory_space<vmem>>) attributes {dimension_semantics = [#tpu.dimension_semantics<parallel>, #tpu.dimension_semantics<arbitrary>], iteration_bounds = array<i64: 1, 1>, scalar_prefetch = 0 : i64, scratch_operands = 1 : i64, tpu.core_type = #tpu.core_type<tc>, window_params = [{transform_indices = @transform_0, window_bounds = array<i64: 16, 32>}, {transform_indices = @transform_1, window_bounds = array<i64: 32, 128>}, {transform_indices = @transform_2, window_bounds = array<i64: 1, 128>}, {transform_indices = @transform_3, window_bounds = array<i64: 128, 32>}, {pipeline_mode = #tpu.pipeline_mode<synchronous>, transform_indices = @transform_4, window_bounds = array<i64: 1, 32>}, {transform_indices = @transform_5, window_bounds = array<i64: 16, 32>}]} {
    %c0_i32 = arith.constant 0 : i32
    %0 = arith.cmpi eq, %arg1, %c0_i32 : i32
    %1 = arith.extui %0 : i1 to i32
    %c0_i32_0 = arith.constant 0 : i32
    %2 = arith.cmpi ne, %1, %c0_i32_0 : i32
    scf.if %2 {
      %cst_18 = arith.constant 0.000000e+00 : f32
      %25 = vector.broadcast %cst_18 : f32 to vector<16x32xf32>
      %c0_19 = arith.constant 0 : index
      %c0_20 = arith.constant 0 : index
      %26 = vector.load %arg8[%c0_19, %c0_20] : memref<16x32xf32, #tpu.memory_space<vmem>>, vector<16x32xf32>
      tpu.vector_store %arg8[%c0_19, %c0_20], %25 {strides = array<i32>} : memref<16x32xf32, #tpu.memory_space<vmem>>, vector<16x32xf32>,
    } else {
    }
    %c0 = arith.constant 0 : index
    %c0_1 = arith.constant 0 : index
    %3 = vector.load %arg2[%c0, %c0_1] : memref<16x32xf32, #tpu.memory_space<vmem>>, vector<16x32xf32>
    %c0_2 = arith.constant 0 : index
    %c0_3 = arith.constant 0 : index
    %4 = vector.load %arg3[%c0_2, %c0_3] : memref<32x128xf32, #tpu.memory_space<vmem>>, vector<32x128xf32>
    %cst = arith.constant dense<0.000000e+00> : vector<16x128xf32>
    %5 = tpu.matmul %3, %4, %cst {dimension_numbers = #tpu.dot_dimension_numbers<[1], [0], [0], [1], [0, 0, 1, 1], [], []>} : vector<16x32xf32>, vector<32x128xf32>, vector<16x128xf32> -> vector<16x128xf32>
    %c0_4 = arith.constant 0 : index
    %c0_5 = arith.constant 0 : index
    %6 = vector.load %arg4[%c0_4, %c0_5] : memref<1x128xf32, #tpu.memory_space<vmem>>, vector<1x128xf32>
    %7 = vector.broadcast %6 : vector<1x128xf32> to vector<16x128xf32>
    %8 = arith.addf %5, %7 : vector<16x128xf32>
    %cst_6 = arith.constant 5.000000e-01 : f32
    %9 = vector.broadcast %cst_6 : f32 to vector<16x128xf32>
    %10 = arith.mulf %9, %8 : vector<16x128xf32>
    %cst_7 = arith.constant 0.707106769 : f32
    %11 = vector.broadcast %cst_7 : f32 to vector<16x128xf32>
    %12 = arith.mulf %8, %11 : vector<16x128xf32>
    %13 = math.erf %12 : vector<16x128xf32>
    %cst_8 = arith.constant 1.000000e+00 : f32
    %14 = vector.broadcast %cst_8 : f32 to vector<16x128xf32>
    %15 = arith.addf %14, %13 : vector<16x128xf32>
    %16 = arith.mulf %10, %15 : vector<16x128xf32>
    %c0_9 = arith.constant 0 : index
    %c0_10 = arith.constant 0 : index
    %17 = vector.load %arg8[%c0_9, %c0_10] : memref<16x32xf32, #tpu.memory_space<vmem>>, vector<16x32xf32>
    %c0_11 = arith.constant 0 : index
    %c0_12 = arith.constant 0 : index
    %18 = vector.load %arg5[%c0_11, %c0_12] : memref<128x32xf32, #tpu.memory_space<vmem>>, vector<128x32xf32>
    %cst_13 = arith.constant dense<0.000000e+00> : vector<16x32xf32>
    %19 = tpu.matmul %16, %18, %cst_13 {dimension_numbers = #tpu.dot_dimension_numbers<[1], [0], [0], [1], [0, 0, 1, 1], [], []>} : vector<16x128xf32>, vector<128x32xf32>, vector<16x32xf32> -> vector<16x32xf32>
    %20 = arith.addf %17, %19 : vector<16x32xf32>
    %c0_14 = arith.constant 0 : index
    %c0_15 = arith.constant 0 : index
    %21 = vector.load %arg8[%c0_14, %c0_15] : memref<16x32xf32, #tpu.memory_space<vmem>>, vector<16x32xf32>
    tpu.vector_store %arg8[%c0_14, %c0_15], %20 {strides = array<i32>} : memref<16x32xf32, #tpu.memory_space<vmem>>, vector<16x32xf32>,
    %c0_i32_16 = arith.constant 0 : i32
    %22 = arith.cmpi eq, %arg1, %c0_i32_16 : i32
    %23 = arith.extui %22 : i1 to i32
    %c0_i32_17 = arith.constant 0 : i32
    %24 = arith.cmpi ne, %23, %c0_i32_17 : i32
    scf.if %24 {
      %c0_18 = arith.constant 0 : index
      %c0_19 = arith.constant 0 : index
      %25 = vector.load %arg8[%c0_18, %c0_19] : memref<16x32xf32, #tpu.memory_space<vmem>>, vector<16x32xf32>
      %c0_20 = arith.constant 0 : index
      %c0_21 = arith.constant 0 : index
      %26 = vector.load %arg6[%c0_20, %c0_21] : memref<1x32xf32, #tpu.memory_space<vmem>>, vector<1x32xf32>
      %27 = vector.broadcast %26 : vector<1x32xf32> to vector<16x32xf32>
      %28 = arith.addf %25, %27 : vector<16x32xf32>
      %c0_22 = arith.constant 0 : index
      %c0_23 = arith.constant 0 : index
      %29 = vector.load %arg7[%c0_22, %c0_23] : memref<16x32xf32, #tpu.memory_space<vmem>>, vector<16x32xf32>
      tpu.vector_store %arg7[%c0_22, %c0_23], %28 {strides = array<i32>} : memref<16x32xf32, #tpu.memory_space<vmem>>, vector<16x32xf32>,
    } else {
    }
    return
  }
  func.func @transform_0(%arg0: i32, %arg1: i32) -> (i32, i32) {
    %c0_i32 = arith.constant 0 : i32
    %c0_i32_0 = arith.constant 0 : i32
    return %arg0, %c0_i32 : i32, i32
  }
  func.func @transform_1(%arg0: i32, %arg1: i32) -> (i32, i32) {
    %c0_i32 = arith.constant 0 : i32
    %c0_i32_0 = arith.constant 0 : i32
    return %c0_i32, %arg1 : i32, i32
  }
  func.func @transform_2(%arg0: i32, %arg1: i32) -> (i32, i32) {
    %c0_i32 = arith.constant 0 : i32
    %c0_i32_0 = arith.constant 0 : i32
    return %c0_i32, %arg1 : i32, i32
  }
  func.func @transform_3(%arg0: i32, %arg1: i32) -> (i32, i32) {
    %c0_i32 = arith.constant 0 : i32
    %c0_i32_0 = arith.constant 0 : i32
    return %arg1, %c0_i32 : i32, i32
  }
  func.func @transform_4(%arg0: i32, %arg1: i32) -> (i32, i32) {
    %c0_i32 = arith.constant 0 : i32
    %c0_i32_0 = arith.constant 0 : i32
    %c0_i32_1 = arith.constant 0 : i32
    return %c0_i32, %c0_i32_0 : i32, i32
  }
  func.func @transform_5(%arg0: i32, %arg1: i32) -> (i32, i32) {
    %c0_i32 = arith.constant 0 : i32
    %c0_i32_0 = arith.constant 0 : i32
    return %arg0, %c0_i32 : i32, i32
  }
}

</mosaic_0001>

<llo_original>
// kernel: tpu_custom_call.1
$region0: #{tpu_custom_call.1}
  #allocation0 [shape = 'u32[]', space=smem, size = 0x4, offset = 0x4, fixed_abs, tag = 'smem constant byte address 0x4 - core index']
  #allocation1 [shape = 'u32[144,128]{1,0:T(1,128)}', space=vmem, size = 0x12000, scoped, tag = 'internal scratch']
  #allocation2 [shape = 'f32[16,32]{1,0:T(8,128)}', space=vmem, size = 0x2000, scoped, tag = 'scratch operand']
  %s0 = inlined_call_operand.vmem [shape: f32[16,32], index: 0, kind: input, shape index: {}]
  %s1 = inlined_call_operand.vmem [shape: f32[32,128], index: 1, kind: input, shape index: {}]
  %s2 = inlined_call_operand.vmem [shape: f32[1,128], index: 2, kind: input, shape index: {}]
  %s3 = inlined_call_operand.vmem [shape: f32[128,32], index: 3, kind: input, shape index: {}]
  %s4 = inlined_call_operand.vmem [shape: f32[1,32], index: 4, kind: input, shape index: {}]
  %s5 = inlined_call_operand.hbm [shape: f32[16,32], index: 5, kind: output, shape index: {}]
  %s6 = sld [smem:[#allocation0]]
  $region38: #{tpu_custom_call.1} parent=0
    _
  %s8 = ssub.s32 1, %s6
  %s9 = scalar_select 0, %s8, %s6
  $region1: #{tpu_custom_call.1} parent=0
    #allocation3 [shape = 'u8[8192]{0}', space=vmem, size = 0x2000, scoped, tag = 'output window, operand 0, single buffered']
    #allocation4 [shape = 's32[1]{0}', space=sflag, size = 0x4, scoped, tag = 'scoped memory for tpu_custom_call.1']
    %10 = vsyncpa [#allocation4], 0
    // Predicated region
    $region2: #{tpu_custom_call.1} parent=1 // pred_check
      _
    $region3: #{tpu_custom_call.1} parent=1 // pred_check_branch
      %12 = sbr.rel (0) target = $region5
    $region4: #{tpu_custom_call.1} parent=1 // pred_region
      _
    $region5: #{tpu_custom_call.1} parent=1 // pred_fallthru
      _
    // Predicated region
    $region6: #{tpu_custom_call.1} parent=1 // pred_check
      _
    $region7: #{tpu_custom_call.1} parent=1 // pred_check_branch
      %14 = sbr.rel (0) target = $region9
    $region8: #{tpu_custom_call.1} parent=1 // pred_region
      _
    $region9: #{tpu_custom_call.1} parent=1 // pred_fallthru
      _
    // Predicated region
    $region10: #{tpu_custom_call.1} parent=1 // pred_check
      _
    $region11: #{tpu_custom_call.1} parent=1 // pred_check_branch
      %16 = sbr.rel (0) target = $region13
    $region12: #{tpu_custom_call.1} parent=1 // pred_region
      _
    $region13: #{tpu_custom_call.1} parent=1 // pred_fallthru
      _
    // Predicated region
    $region14: #{tpu_custom_call.1} parent=1 // pred_check
      _
    $region15: #{tpu_custom_call.1} parent=1 // pred_check_branch
      %18 = sbr.rel (0) target = $region17
    $region16: #{tpu_custom_call.1} parent=1 // pred_region
      _
    $region17: #{tpu_custom_call.1} parent=1 // pred_fallthru
      _
    // Predicated region
    $region18: #{tpu_custom_call.1} parent=1 // pred_check
      _
    $region19: #{tpu_custom_call.1} parent=1 // pred_check_branch
      %20 = sbr.rel (0) target = $region21
    $region20: #{tpu_custom_call.1} parent=1 // pred_region
      _
    $region21: #{tpu_custom_call.1} parent=1 // pred_fallthru
      _
    %p21 = scmp.eq.s32.totalorder 0, 0
    // Predicated region
    $region22: #{tpu_custom_call.1} parent=1 // pred_check
      %p22 = pneg %p21
    $region23: #{tpu_custom_call.1} parent=1 // pred_check_branch
      %24 = sbr.rel (%p22) target = $region25
    $region24: #{tpu_custom_call.1} parent=1 // pred_region
      %vm25 = vcmask 261120
      %26 = vst.msk [vmem:[#allocation2] sm:$0xff] %vm25, 0.0
      %27 = vst.msk [vmem:[#allocation2 + $0x8] sm:$0xff] %vm25, 0.0
    $region25: #{tpu_custom_call.1} parent=1 // pred_fallthru
      _
    %v28 = vld [vmem:[%s0] sm:$0xff]
    %v29 = vld [vmem:[%s0 + $0x8] sm:$0xff]
    %v30 = vld [vmem:[%s1] sm:$0xff]
    %v31 = vld [vmem:[%s1 + $0x8] sm:$0xff]
    %v32 = vld [vmem:[%s1 + $0x10] sm:$0xff]
    %v33 = vld [vmem:[%s1 + $0x18] sm:$0xff]
    %v34 = vld [vmem:[%s2] sm:$0x1]
    %v36 = vlaneseq
    %v37 = vshrl.u32 %v36, 7
    %v38 = vsub.s32 0, %v37
    %v39 = vrot.slane %v34, %v38
    %vm41 = vcmask 261120
    %v43 = vsel %vm41, %v28, 0
    %v46 = vsel %vm41, %v29, 0
    %48 = vmatprep.subr.mxu0 0.0
    %49 = vmatpush1.msra.mxu0 0.0
    %50 = vmatprep.subr.mxu0 0.0
    %51 = vmatpush1.msra.mxu0 0.0
    %52 = vmatprep.subr.mxu0 0.0
    %53 = vmatpush1.msra.mxu0 0.0
    %54 = vmatprep.subr.mxu0 0.0
    %55 = vmatpush1.msra.mxu0 0.0
    %56 = vmatprep.subr.mxu0 0.0
    %57 = vmatpush1.msra.mxu0 0.0
    %58 = vmatprep.subr.mxu0 0.0
    %59 = vmatpush1.msra.mxu0 0.0
    %60 = vmatprep.subr.mxu0 0.0
    %61 = vmatpush1.msra.mxu0 0.0
    %62 = vmatprep.subr.mxu0 0.0
    %63 = vmatpush1.msra.mxu0 0.0
    %64 = vmatprep.subr.mxu0 0.0
    %65 = vmatpush1.msra.mxu0 0.0
    %66 = vmatprep.subr.mxu0 0.0
    %67 = vmatpush1.msra.mxu0 0.0
    %68 = vmatprep.subr.mxu0 0.0
    %69 = vmatpush1.msra.mxu0 0.0
    %70 = vmatprep.subr.mxu0 0.0
    %71 = vmatpush1.msra.mxu0 0.0
    %72 = vmatprep.subr.mxu0 0.0
    %73 = vmatpush1.msra.mxu0 %v33
    %74 = vmatprep.subr.mxu0 0.0
    %75 = vmatpush1.msra.mxu0 %v32
    %76 = vmatprep.subr.mxu0 0.0
    %77 = vmatpush1.msra.mxu0 %v31
    %78 = vmatprep.subr.mxu0 0.0
    %79 = vmatpush1.msra.mxu0 %v30
    %80 = vmatprep.subr.mxu0 0.0
    %81 = vmatpush2.msra.mxu0 0.0
    %82 = vmatprep.subr.mxu0 0.0
    %83 = vmatpush2.msra.mxu0 0.0
    %84 = vmatprep.subr.mxu0 0.0
    %85 = vmatpush2.msra.mxu0 0.0
    %86 = vmatprep.subr.mxu0 0.0
    %87 = vmatpush2.msra.mxu0 0.0
    %88 = vmatprep.subr.mxu0 0.0
    %89 = vmatpush2.msra.mxu0 0.0
    %90 = vmatprep.subr.mxu0 0.0
    %91 = vmatpush2.msra.mxu0 0.0
    %92 = vmatprep.subr.mxu0 0.0
    %93 = vmatpush2.msra.mxu0 0.0
    %94 = vmatprep.subr.mxu0 0.0
    %95 = vmatpush2.msra.mxu0 0.0
    %96 = vmatprep.subr.mxu0 0.0
    %97 = vmatpush2.msra.mxu0 0.0
    %98 = vmatprep.subr.mxu0 0.0
    %99 = vmatpush2.msra.mxu0 0.0
    %100 = vmatprep.subr.mxu0 0.0
    %101 = vmatpush2.msra.mxu0 0.0
    %102 = vmatprep.subr.mxu0 0.0
    %103 = vmatpush2.msra.mxu0 0.0
    %104 = vmatprep.subr.mxu0 0.0
    %105 = vmatpush2.msra.mxu0 0.0
    %106 = vmatprep.subr.mxu0 0.0
    %107 = vmatpush2.msra.mxu0 0.0
    %108 = vmatprep.subr.mxu0 0.0
    %109 = vmatpush2.msra.mxu0 0.0
    %110 = vmatprep.subr.mxu0 0.0
    %111 = vmatpush2.msra.mxu0 0.0
    %112 = vmatprep.mubr.f32.mxu0 0.0
    %113 = vmatmul.mubr.f32.gmra.mxu0 %v43
    %v114 = vpop.f32.mrf.mxu0
    %v115 = vadd.f32 %v39, %v114
    %v116 = vpop.f32.mrf.mxu0
    %117 = vmatprep.mubr.f32.mxu0 0.0
    %118 = vmatmul.mubr.f32.gmra.mxu0 %v46
    %v119 = vpop.f32.mrf.mxu0
    %v120 = vadd.f32 %v39, %v119
    %v121 = vpop.f32.mrf.mxu0
    %122 = vdwg.mxu0
    %v123 = vmul.f32 %v115, 0.5
    %v124 = vmul.f32 %v120, 0.5
    %v125 = vmul.f32 %v115, 0.70710677
    %v126 = vmul.f32 %v120, 0.70710677
    %v127 = verf.f32.pop %v125
    %v128 = verf.f32.pop %v126
    %v129 = vadd.f32 %v127, 1.0
    %v130 = vadd.f32 %v128, 1.0
    %v131 = vmul.f32 %v123, %v129
    %v132 = vmul.f32 %v124, %v130
    %v133 = vld [vmem:[#allocation2] sm:$0xff]
    %v134 = vld [vmem:[#allocation2 + $0x8] sm:$0xff]
    %v135 = vld [vmem:[%s3] sm:$0xff]
    %v136 = vld [vmem:[%s3 + $0x8] sm:$0xff]
    %v137 = vld [vmem:[%s3 + $0x10] sm:$0xff]
    %v138 = vld [vmem:[%s3 + $0x18] sm:$0xff]
    %v139 = vld [vmem:[%s3 + $0x20] sm:$0xff]
    %v140 = vld [vmem:[%s3 + $0x28] sm:$0xff]
    %v141 = vld [vmem:[%s3 + $0x30] sm:$0xff]
    %v142 = vld [vmem:[%s3 + $0x38] sm:$0xff]
    %v143 = vld [vmem:[%s3 + $0x40] sm:$0xff]
    %v144 = vld [vmem:[%s3 + $0x48] sm:$0xff]
    %v145 = vld [vmem:[%s3 + $0x50] sm:$0xff]
    %v146 = vld [vmem:[%s3 + $0x58] sm:$0xff]
    %v147 = vld [vmem:[%s3 + $0x60] sm:$0xff]
    %v148 = vld [vmem:[%s3 + $0x68] sm:$0xff]
    %v149 = vld [vmem:[%s3 + $0x70] sm:$0xff]
    %v150 = vld [vmem:[%s3 + $0x78] sm:$0xff]
    %151 = vmatprep.subr.mxu0 0.0
    %152 = vmatpush1.msra.mxu0 %v150
    %153 = vmatprep.subr.mxu0 0.0
    %154 = vmatpush1.msra.mxu0 %v149
    %155 = vmatprep.subr.mxu0 0.0
    %156 = vmatpush1.msra.mxu0 %v148
    %157 = vmatprep.subr.mxu0 0.0
    %158 = vmatpush1.msra.mxu0 %v147
    %159 = vmatprep.subr.mxu0 0.0
    %160 = vmatpush1.msra.mxu0 %v146
    %161 = vmatprep.subr.mxu0 0.0
    %162 = vmatpush1.msra.mxu0 %v145
    %163 = vmatprep.subr.mxu0 0.0
    %164 = vmatpush1.msra.mxu0 %v144
    %165 = vmatprep.subr.mxu0 0.0
    %166 = vmatpush1.msra.mxu0 %v143
    %167 = vmatprep.subr.mxu0 0.0
    %168 = vmatpush1.msra.mxu0 %v142
    %169 = vmatprep.subr.mxu0 0.0
    %170 = vmatpush1.msra.mxu0 %v141
    %171 = vmatprep.subr.mxu0 0.0
    %172 = vmatpush1.msra.mxu0 %v140
    %173 = vmatprep.subr.mxu0 0.0
    %174 = vmatpush1.msra.mxu0 %v139
    %175 = vmatprep.subr.mxu0 0.0
    %176 = vmatpush1.msra.mxu0 %v138
    %177 = vmatprep.subr.mxu0 0.0
    %178 = vmatpush1.msra.mxu0 %v137
    %179 = vmatprep.subr.mxu0 0.0
    %180 = vmatpush1.msra.mxu0 %v136
    %181 = vmatprep.subr.mxu0 0.0
    %182 = vmatpush1.msra.mxu0 %v135
    %183 = vmatprep.subr.mxu0 0.0
    %184 = vmatpush2.msra.mxu0 0.0
    %185 = vmatprep.subr.mxu0 0.0
    %186 = vmatpush2.msra.mxu0 0.0
    %187 = vmatprep.subr.mxu0 0.0
    %188 = vmatpush2.msra.mxu0 0.0
    %189 = vmatprep.subr.mxu0 0.0
    %190 = vmatpush2.msra.mxu0 0.0
    %191 = vmatprep.subr.mxu0 0.0
    %192 = vmatpush2.msra.mxu0 0.0
    %193 = vmatprep.subr.mxu0 0.0
    %194 = vmatpush2.msra.mxu0 0.0
    %195 = vmatprep.subr.mxu0 0.0
    %196 = vmatpush2.msra.mxu0 0.0
    %197 = vmatprep.subr.mxu0 0.0
    %198 = vmatpush2.msra.mxu0 0.0
    %199 = vmatprep.subr.mxu0 0.0
    %200 = vmatpush2.msra.mxu0 0.0
    %201 = vmatprep.subr.mxu0 0.0
    %202 = vmatpush2.msra.mxu0 0.0
    %203 = vmatprep.subr.mxu0 0.0
    %204 = vmatpush2.msra.mxu0 0.0
    %205 = vmatprep.subr.mxu0 0.0
    %206 = vmatpush2.msra.mxu0 0.0
    %207 = vmatprep.subr.mxu0 0.0
    %208 = vmatpush2.msra.mxu0 0.0
    %209 = vmatprep.subr.mxu0 0.0
    %210 = vmatpush2.msra.mxu0 0.0
    %211 = vmatprep.subr.mxu0 0.0
    %212 = vmatpush2.msra.mxu0 0.0
    %213 = vmatprep.subr.mxu0 0.0
    %214 = vmatpush2.msra.mxu0 0.0
    %215 = vmatprep.mubr.f32.mxu0 0.0
    %216 = vmatmul.mubr.f32.gmra.mxu0 %v131
    %v217 = vpop.f32.mrf.mxu0
    %v218 = vadd.f32 0.0, %v217
    %v219 = vpop.f32.mrf.mxu0
    %220 = vmatprep.mubr.f32.mxu0 0.0
    %221 = vmatmul.mubr.f32.gmra.mxu0 %v132
    %v222 = vpop.f32.mrf.mxu0
    %v223 = vadd.f32 0.0, %v222
    %v224 = vpop.f32.mrf.mxu0
    %225 = vdwg.mxu0
    %v226 = vadd.f32 %v133, %v218
    %v227 = vadd.f32 %v134, %v223
    %228 = vst.msk [vmem:[#allocation2] sm:$0xff] %vm41, %v226
    %229 = vst.msk [vmem:[#allocation2 + $0x8] sm:$0xff] %vm41, %v227
    // Predicated region
    $region26: #{tpu_custom_call.1} parent=1 // pred_check
      %p230 = pneg %p21
    $region27: #{tpu_custom_call.1} parent=1 // pred_check_branch
      %232 = sbr.rel (%p230) target = $region29
    $region28: #{tpu_custom_call.1} parent=1 // pred_region
      %v233 = vld [vmem:[#allocation2] sm:$0xff]
      %v234 = vld [vmem:[#allocation2 + $0x8] sm:$0xff]
      %v235 = vld [vmem:[%s4] sm:$0x1]
      %v237 = vlaneseq
      %v238 = vshrl.u32 %v237, 7
      %v239 = vsub.s32 0, %v238
      %v240 = vrot.slane %v235, %v239
      %v242 = vadd.f32 %v233, %v240
      %v243 = vadd.f32 %v234, %v240
      %244 = vst.msk [vmem:[#allocation3] sm:$0xff] %vm41, %v242
      %245 = vst.msk [vmem:[#allocation3 + $0x8] sm:$0xff] %vm41, %v243
    $region29: #{tpu_custom_call.1} parent=1 // pred_fallthru
      _
    // Predicated region
    $region30: #{tpu_custom_call.1} parent=1 // pred_check
      _
    $region31: #{tpu_custom_call.1} parent=1 // pred_check_branch
      %247 = sbr.rel (0) target = $region33
    $region32: #{tpu_custom_call.1} parent=1 // pred_region
      %s249 = ssub.s32 256, 256
      %250 = vsyncadd [#allocation4], %s249
      %s251 = sshll.u32 [#allocation3], 4
      %s252 = int_to_ptr.vmem [resolvable:$true] %s251
      %257 = dma.vmem_to_hbm [thread:$0]  %s252, 256, %s5, [#allocation4], 128, 128, 8
    $region33: #{tpu_custom_call.1} parent=1 // pred_fallthru
      _
    // Predicated region
    $region34: #{tpu_custom_call.1} parent=1 // pred_check
      _
    $region35: #{tpu_custom_call.1} parent=1 // pred_check_branch
      %259 = sbr.rel (0) target = $region37
    $region36: #{tpu_custom_call.1} parent=1 // pred_region
      %260 = dma.done [#allocation4], 256
    $region37: #{tpu_custom_call.1} parent=1 // pred_fallthru
      _
    %261 = vsyncpa [#allocation4], 1

</llo_original>
